<compile_context>
chip_gen: v6e
topology: v6e:2x2x1
jax: 0.10.0
libtpu: 0.0.40
codegen_flags: <defaults>
</compile_context>

<pallas_src>
import jax
import jax.numpy as jnp
from jax.experimental import pallas as pl
from jax.experimental.pallas import tpu as pltpu


def gcn_kernel(x_ref, tilde_ref, w1_ref, b1_ref, w2_ref, b2_ref, out_ref):
    tilde = tilde_ref[...]                                     # (N, N) f32

    # --- normalize(tilde), folded into a per-column scale (never materialize
    # the N x N normalized matrix).  PyTorch broadcasting:
    #   norm[i, j] = sqrt(D1[j]) * tilde[i, j] * sqrt(D2[j])
    # so  norm @ y == tilde @ (s_col * y),  s_col[j] = sqrt(D1[j] * D2[j]).
    d1 = jnp.sum(tilde, axis=0, keepdims=True)                 # (1, N) column sums
    d2 = jnp.sum(tilde, axis=1, keepdims=True)                 # (N, 1) row sums
    s_col = jnp.sqrt(jnp.transpose(d1) * d2)                   # (N, 1), single fused sqrt

    # --- GCN layer 1: Linear + propagate + ReLU ---
    z1 = jnp.dot(x_ref[...], w1_ref[...],
                 preferred_element_type=jnp.float32) + b1_ref[...]     # (N, Hp)
    h = jnp.dot(tilde, s_col * z1, preferred_element_type=jnp.float32)  # (N, Hp)
    h = jnp.maximum(h, 0.0)

    # --- GCN layer 2: Linear + propagate ---
    z2 = jnp.dot(h, w2_ref[...],
                 preferred_element_type=jnp.float32) + b2_ref[...]     # (N, Cp)
    o = jnp.dot(tilde, s_col * z2, preferred_element_type=jnp.float32)  # (N, Cp)

    out_ref[...] = o.astype(out_ref.dtype)


def _pad_to(n, lane=128):
    return max(lane, ((n + lane - 1) // lane) * lane)


def gcn_forward(x, tilde, w1, b1, w2, b2):
    """x: (N, F), tilde: (N, N), w1: (F, H), b1: (1, H), w2: (H, C), b2: (1, C)."""
    N, F = x.shape
    H = w1.shape[1]
    C = w2.shape[1]

    # Zero-pad hidden / class dims to the 128-lane width: lane-dense stores and
    # full MXU columns.  Padded columns are exactly zero and sliced off below.
    Hp = _pad_to(H)
    Cp = _pad_to(C)
    w1p = jnp.zeros((F, Hp), w1.dtype).at[:, :H].set(w1)
    b1p = jnp.zeros((1, Hp), b1.dtype).at[:, :H].set(b1)
    w2p = jnp.zeros((Hp, Cp), w2.dtype).at[:H, :C].set(w2)
    b2p = jnp.zeros((1, Cp), b2.dtype).at[:, :C].set(b2)

    out_p = pl.pallas_call(
        gcn_kernel,
        out_shape=jax.ShapeDtypeStruct((N, Cp), jnp.float32),
        grid=(1,),
        in_specs=[
            pl.BlockSpec((N, F), lambda i: (0, 0)),
            pl.BlockSpec((N, N), lambda i: (0, 0)),
            pl.BlockSpec((F, Hp), lambda i: (0, 0)),
            pl.BlockSpec((1, Hp), lambda i: (0, 0)),
            pl.BlockSpec((Hp, Cp), lambda i: (0, 0)),
            pl.BlockSpec((1, Cp), lambda i: (0, 0)),
        ],
        out_specs=pl.BlockSpec((N, Cp), lambda i: (0, 0)),
        compiler_params=pltpu.CompilerParams(
            dimension_semantics=("arbitrary",),
            vmem_limit_bytes=32 * 1024 * 1024,
        ),
    )(x, tilde, w1p, b1p, w2p, b2p)

    return out_p[:, :C]


def reference_forward(x, tilde, w1, b1, w2, b2):
    """Pure-JAX reference mirroring the PyTorch forward semantics exactly."""
    d1 = jnp.sum(tilde, axis=0)
    d2 = jnp.sum(tilde, axis=1)
    norm = (d1 ** 0.5) * tilde * (d2 ** 0.5)   # both broadcast as row vectors
    h = x @ w1 + b1
    h = norm @ h
    h = jnp.maximum(h, 0.0)
    o = h @ w2 + b2
    o = norm @ o
    return o


if __name__ == "__main__":
    # Shapes consistent with the module: N nodes, feature_dim=32,
    # hidden_dim=64, num_classes=16.
    N, F, H, C = 128, 32, 64, 16

    key = jax.random.PRNGKey(0)
    kx, kt, kw1, kb1, kw2, kb2 = jax.random.split(key, 6)

    x = jax.random.normal(kx, (N, F), dtype=jnp.float32)

    # tilde: symmetric-ish nonnegative adjacency with self loops
    # (positive so sqrt is well defined)
    a = jax.random.uniform(kt, (N, N), dtype=jnp.float32)
    tilde = (a + a.T) * 0.5 + jnp.eye(N, dtype=jnp.float32)

    # PyTorch Linear params, pre-transposed: weight -> (in, out), bias -> (1, out).
    w1 = jax.random.uniform(kw1, (F, H), dtype=jnp.float32, minval=-1.0, maxval=1.0) / jnp.sqrt(F)
    b1 = jax.random.uniform(kb1, (1, H), dtype=jnp.float32, minval=-1.0, maxval=1.0) / jnp.sqrt(F)
    w2 = jax.random.uniform(kw2, (H, C), dtype=jnp.float32, minval=-1.0, maxval=1.0) / jnp.sqrt(H)
    b2 = jax.random.uniform(kb2, (1, C), dtype=jnp.float32, minval=-1.0, maxval=1.0) / jnp.sqrt(H)

    out = gcn_forward(x, tilde, w1, b1, w2, b2)
    out = jax.block_until_ready(out)

    ref = reference_forward(x, tilde, w1, b1, w2, b2)
    assert out.shape == (N, C)

    # The kernel uses an algebraically-equivalent reordering of the
    # normalization, so compare with a tolerance relative to the output scale.
    scale = jnp.max(jnp.abs(ref))
    max_err = jnp.max(jnp.abs(out - ref))
    assert max_err <= 1e-3 * scale + 1e-5, f"Pallas output mismatch: {max_err} vs scale {scale}"

    print("KERNEL_OK")
</pallas_src>

<mosaic_0001>
module attributes {stable_mosaic.version = 11 : i64} {
  func.func @gcn_kernel(%arg0: i32, %arg1: memref<128x32xf32, #tpu.memory_space<vmem>>, %arg2: memref<128x128xf32, #tpu.memory_space<vmem>>, %arg3: memref<32x128xf32, #tpu.memory_space<vmem>>, %arg4: memref<1x128xf32, #tpu.memory_space<vmem>>, %arg5: memref<128x128xf32, #tpu.memory_space<vmem>>, %arg6: memref<1x128xf32, #tpu.memory_space<vmem>>, %arg7: memref<128x128xf32, #tpu.memory_space<vmem>>) attributes {dimension_semantics = [#tpu.dimension_semantics<arbitrary>], iteration_bounds = array<i64: 1>, scalar_prefetch = 0 : i64, scratch_operands = 0 : i64, tpu.core_type = #tpu.core_type<tc>, window_params = [{pipeline_mode = #tpu.pipeline_mode<synchronous>, transform_indices = @transform_0, window_bounds = array<i64: 128, 32>}, {pipeline_mode = #tpu.pipeline_mode<synchronous>, transform_indices = @transform_1, window_bounds = array<i64: 128, 128>}, {pipeline_mode = #tpu.pipeline_mode<synchronous>, transform_indices = @transform_2, window_bounds = array<i64: 32, 128>}, {pipeline_mode = #tpu.pipeline_mode<synchronous>, transform_indices = @transform_3, window_bounds = array<i64: 1, 128>}, {pipeline_mode = #tpu.pipeline_mode<synchronous>, transform_indices = @transform_4, window_bounds = array<i64: 128, 128>}, {pipeline_mode = #tpu.pipeline_mode<synchronous>, transform_indices = @transform_5, window_bounds = array<i64: 1, 128>}, {pipeline_mode = #tpu.pipeline_mode<synchronous>, transform_indices = @transform_6, window_bounds = array<i64: 128, 128>}]} {
    %c0 = arith.constant 0 : index
    %c0_0 = arith.constant 0 : index
    %0 = vector.load %arg2[%c0, %c0_0] : memref<128x128xf32, #tpu.memory_space<vmem>>, vector<128x128xf32>
    %cst = arith.constant dense<0.000000e+00> : vector<128xf32>
    %1 = vector.multi_reduction <add>, %0, %cst [0] : vector<128x128xf32> to vector<128xf32>
    %2 = vector.shape_cast %1 : vector<128xf32> to vector<1x128xf32>
    %cst_1 = arith.constant dense<0.000000e+00> : vector<128xf32>
    %3 = vector.multi_reduction <add>, %0, %cst_1 [1] : vector<128x128xf32> to vector<128xf32>
    %4 = vector.shape_cast %3 : vector<128xf32> to vector<128x1xf32>
    %5 = tpu.transpose %2, [1, 0] : vector<1x128xf32> -> vector<128x1xf32>
    %6 = arith.mulf %5, %4 : vector<128x1xf32>
    %7 = math.sqrt %6 : vector<128x1xf32>
    %c0_2 = arith.constant 0 : index
    %c0_3 = arith.constant 0 : index
    %8 = vector.load %arg1[%c0_2, %c0_3] : memref<128x32xf32, #tpu.memory_space<vmem>>, vector<128x32xf32>
    %c0_4 = arith.constant 0 : index
    %c0_5 = arith.constant 0 : index
    %9 = vector.load %arg3[%c0_4, %c0_5] : memref<32x128xf32, #tpu.memory_space<vmem>>, vector<32x128xf32>
    %cst_6 = arith.constant dense<0.000000e+00> : vector<128x128xf32>
    %10 = tpu.matmul %8, %9, %cst_6 {dimension_numbers = #tpu.dot_dimension_numbers<[1], [0], [0], [1], [0, 0, 1, 1], [], []>} : vector<128x32xf32>, vector<32x128xf32>, vector<128x128xf32> -> vector<128x128xf32>
    %c0_7 = arith.constant 0 : index
    %c0_8 = arith.constant 0 : index
    %11 = vector.load %arg4[%c0_7, %c0_8] : memref<1x128xf32, #tpu.memory_space<vmem>>, vector<1x128xf32>
    %12 = vector.broadcast %11 : vector<1x128xf32> to vector<128x128xf32>
    %13 = arith.addf %10, %12 : vector<128x128xf32>
    %14 = vector.broadcast %7 : vector<128x1xf32> to vector<128x128xf32>
    %15 = arith.mulf %14, %13 : vector<128x128xf32>
    %cst_9 = arith.constant dense<0.000000e+00> : vector<128x128xf32>
    %16 = tpu.matmul %0, %15, %cst_9 {dimension_numbers = #tpu.dot_dimension_numbers<[1], [0], [0], [1], [0, 0, 1, 1], [], []>} : vector<128x128xf32>, vector<128x128xf32>, vector<128x128xf32> -> vector<128x128xf32>
    %cst_10 = arith.constant 0.000000e+00 : f32
    %17 = vector.broadcast %cst_10 : f32 to vector<128x128xf32>
    %18 = arith.maximumf %16, %17 : vector<128x128xf32>
    %c0_11 = arith.constant 0 : index
    %c0_12 = arith.constant 0 : index
    %19 = vector.load %arg5[%c0_11, %c0_12] : memref<128x128xf32, #tpu.memory_space<vmem>>, vector<128x128xf32>
    %cst_13 = arith.constant dense<0.000000e+00> : vector<128x128xf32>
    %20 = tpu.matmul %18, %19, %cst_13 {dimension_numbers = #tpu.dot_dimension_numbers<[1], [0], [0], [1], [0, 0, 1, 1], [], []>} : vector<128x128xf32>, vector<128x128xf32>, vector<128x128xf32> -> vector<128x128xf32>
    %c0_14 = arith.constant 0 : index
    %c0_15 = arith.constant 0 : index
    %21 = vector.load %arg6[%c0_14, %c0_15] : memref<1x128xf32, #tpu.memory_space<vmem>>, vector<1x128xf32>
    %22 = vector.broadcast %21 : vector<1x128xf32> to vector<128x128xf32>
    %23 = arith.addf %20, %22 : vector<128x128xf32>
    %24 = vector.broadcast %7 : vector<128x1xf32> to vector<128x128xf32>
    %25 = arith.mulf %24, %23 : vector<128x128xf32>
    %cst_16 = arith.constant dense<0.000000e+00> : vector<128x128xf32>
    %26 = tpu.matmul %0, %25, %cst_16 {dimension_numbers = #tpu.dot_dimension_numbers<[1], [0], [0], [1], [0, 0, 1, 1], [], []>} : vector<128x128xf32>, vector<128x128xf32>, vector<128x128xf32> -> vector<128x128xf32>
    %c0_17 = arith.constant 0 : index
    %c0_18 = arith.constant 0 : index
    %27 = vector.load %arg7[%c0_17, %c0_18] : memref<128x128xf32, #tpu.memory_space<vmem>>, vector<128x128xf32>
    tpu.vector_store %arg7[%c0_17, %c0_18], %26 {strides = array<i32>} : memref<128x128xf32, #tpu.memory_space<vmem>>, vector<128x128xf32>,
    return
  }
  func.func @transform_0(%arg0: i32) -> (i32, i32) {
    %c0_i32 = arith.constant 0 : i32
    %c0_i32_0 = arith.constant 0 : i32
    %c0_i32_1 = arith.constant 0 : i32
    return %c0_i32, %c0_i32_0 : i32, i32
  }
  func.func @transform_1(%arg0: i32) -> (i32, i32) {
    %c0_i32 = arith.constant 0 : i32
    %c0_i32_0 = arith.constant 0 : i32
    %c0_i32_1 = arith.constant 0 : i32
    return %c0_i32, %c0_i32_0 : i32, i32
  }
  func.func @transform_2(%arg0: i32) -> (i32, i32) {
    %c0_i32 = arith.constant 0 : i32
    %c0_i32_0 = arith.constant 0 : i32
    %c0_i32_1 = arith.constant 0 : i32
    return %c0_i32, %c0_i32_0 : i32, i32
  }
  func.func @transform_3(%arg0: i32) -> (i32, i32) {
    %c0_i32 = arith.constant 0 : i32
    %c0_i32_0 = arith.constant 0 : i32
    %c0_i32_1 = arith.constant 0 : i32
    return %c0_i32, %c0_i32_0 : i32, i32
  }
  func.func @transform_4(%arg0: i32) -> (i32, i32) {
    %c0_i32 = arith.constant 0 : i32
    %c0_i32_0 = arith.constant 0 : i32
    %c0_i32_1 = arith.constant 0 : i32
    return %c0_i32, %c0_i32_0 : i32, i32
  }
  func.func @transform_5(%arg0: i32) -> (i32, i32) {
    %c0_i32 = arith.constant 0 : i32
    %c0_i32_0 = arith.constant 0 : i32
    %c0_i32_1 = arith.constant 0 : i32
    return %c0_i32, %c0_i32_0 : i32, i32
  }
  func.func @transform_6(%arg0: i32) -> (i32, i32) {
    %c0_i32 = arith.constant 0 : i32
    %c0_i32_0 = arith.constant 0 : i32
    %c0_i32_1 = arith.constant 0 : i32
    return %c0_i32, %c0_i32_0 : i32, i32
  }
}

</mosaic_0001>

<llo_original>
// kernel: tpu_custom_call.1
$region0: #{tpu_custom_call.1}
  #allocation0 [shape = 'u32[]', space=smem, size = 0x4, offset = 0x4, fixed_abs, tag = 'smem constant byte address 0x4 - core index']
  #allocation1 [shape = 'u32[144,128]{1,0:T(1,128)}', space=vmem, size = 0x12000, scoped, tag = 'internal scratch']
  %s0 = inlined_call_operand.vmem [shape: f32[128,32], index: 0, kind: input, shape index: {}]
  %s1 = inlined_call_operand.vmem [shape: f32[128,128], index: 1, kind: input, shape index: {}]
  %s2 = inlined_call_operand.vmem [shape: f32[32,128], index: 2, kind: input, shape index: {}]
  %s3 = inlined_call_operand.vmem [shape: f32[1,128], index: 3, kind: input, shape index: {}]
  %s4 = inlined_call_operand.hbm [shape: f32[128,128], index: 4, kind: input, shape index: {}]
  %s5 = inlined_call_operand.vmem [shape: f32[1,128], index: 5, kind: input, shape index: {}]
  %s6 = inlined_call_operand.hbm [shape: f32[128,128], index: 6, kind: output, shape index: {}]
  %s7 = sld [smem:[#allocation0]]
  $region38: #{tpu_custom_call.1} parent=0
    _
  %s9 = ssub.s32 1, %s7
  %s10 = scalar_select 0, %s9, %s7
  $region1: #{tpu_custom_call.1} parent=0
    #allocation2 [shape = 'u8[65536]{0}', space=vmem, size = 0x10000, scoped, tag = 'input window, operand 4, single buffered']
    #allocation3 [shape = 's32[1]{0}', space=sflag, size = 0x4, scoped, tag = 'scoped memory for tpu_custom_call.1']
    #allocation4 [shape = 's32[1]{0}', space=sflag, size = 0x4, scoped, tag = 'scoped memory for tpu_custom_call.1']
    #allocation5 [shape = 'u8[65536]{0}', space=vmem, size = 0x10000, scoped, tag = 'output window, operand 0, single buffered']
    %11 = vsyncpa [#allocation3], 0
    %12 = vsyncpa [#allocation4], 0
    // Predicated region
    $region2: #{tpu_custom_call.1} parent=1 // pred_check
      _
    $region3: #{tpu_custom_call.1} parent=1 // pred_check_branch
      %14 = sbr.rel (0) target = $region5
    $region4: #{tpu_custom_call.1} parent=1 // pred_region
      _
    $region5: #{tpu_custom_call.1} parent=1 // pred_fallthru
      _
    // Predicated region
    $region6: #{tpu_custom_call.1} parent=1 // pred_check
      _
    $region7: #{tpu_custom_call.1} parent=1 // pred_check_branch
      %16 = sbr.rel (0) target = $region9
    $region8: #{tpu_custom_call.1} parent=1 // pred_region
      _
    $region9: #{tpu_custom_call.1} parent=1 // pred_fallthru
      _
    // Predicated region
    $region10: #{tpu_custom_call.1} parent=1 // pred_check
      _
    $region11: #{tpu_custom_call.1} parent=1 // pred_check_branch
      %18 = sbr.rel (0) target = $region13
    $region12: #{tpu_custom_call.1} parent=1 // pred_region
      _
    $region13: #{tpu_custom_call.1} parent=1 // pred_fallthru
      _
    // Predicated region
    $region14: #{tpu_custom_call.1} parent=1 // pred_check
      _
    $region15: #{tpu_custom_call.1} parent=1 // pred_check_branch
      %20 = sbr.rel (0) target = $region17
    $region16: #{tpu_custom_call.1} parent=1 // pred_region
      _
    $region17: #{tpu_custom_call.1} parent=1 // pred_fallthru
      _
    // Predicated region
    $region18: #{tpu_custom_call.1} parent=1 // pred_check
      _
    $region19: #{tpu_custom_call.1} parent=1 // pred_check_branch
      %22 = sbr.rel (0) target = $region21
    $region20: #{tpu_custom_call.1} parent=1 // pred_region
      %s24 = ssub.s32 2048, 2048
      %25 = vsyncadd [#allocation3], %s24
      %s26 = sshll.u32 [#allocation2], 4
      %s27 = int_to_ptr.vmem [resolvable:$true] %s26
      %32 = dma.hbm_to_vmem [thread:$0]  %s4, 2048, %s27, [#allocation3], 128, 128, 8
    $region21: #{tpu_custom_call.1} parent=1 // pred_fallthru
      _
    // Predicated region
    $region22: #{tpu_custom_call.1} parent=1 // pred_check
      _
    $region23: #{tpu_custom_call.1} parent=1 // pred_check_branch
      %34 = sbr.rel (0) target = $region25
    $region24: #{tpu_custom_call.1} parent=1 // pred_region
      _
    $region25: #{tpu_custom_call.1} parent=1 // pred_fallthru
      _
    // Predicated region
    $region26: #{tpu_custom_call.1} parent=1 // pred_check
      _
    $region27: #{tpu_custom_call.1} parent=1 // pred_check_branch
      %36 = sbr.rel (0) target = $region29
    $region28: #{tpu_custom_call.1} parent=1 // pred_region
      %37 = dma.done [#allocation3], 2048
    $region29: #{tpu_custom_call.1} parent=1 // pred_fallthru
      _
    %v38 = vld [vmem:[%s1] sm:$0xff]
    %v39 = vld [vmem:[%s1 + $0x8] sm:$0xff]
    %v40 = vld [vmem:[%s1 + $0x10] sm:$0xff]
    %v41 = vld [vmem:[%s1 + $0x18] sm:$0xff]
    %v42 = vld [vmem:[%s1 + $0x20] sm:$0xff]
    %v43 = vld [vmem:[%s1 + $0x28] sm:$0xff]
    %v44 = vld [vmem:[%s1 + $0x30] sm:$0xff]
    %v45 = vld [vmem:[%s1 + $0x38] sm:$0xff]
    %v46 = vld [vmem:[%s1 + $0x40] sm:$0xff]
    %v47 = vld [vmem:[%s1 + $0x48] sm:$0xff]
    %v48 = vld [vmem:[%s1 + $0x50] sm:$0xff]
    %v49 = vld [vmem:[%s1 + $0x58] sm:$0xff]
    %v50 = vld [vmem:[%s1 + $0x60] sm:$0xff]
    %v51 = vld [vmem:[%s1 + $0x68] sm:$0xff]
    %v52 = vld [vmem:[%s1 + $0x70] sm:$0xff]
    %v53 = vld [vmem:[%s1 + $0x78] sm:$0xff]
    %v54 = vadd.f32 %v38, %v39
    %v55 = vadd.f32 %v54, %v40
    %v56 = vadd.f32 %v55, %v41
    %v57 = vadd.f32 %v56, %v42
    %v58 = vadd.f32 %v57, %v43
    %v59 = vadd.f32 %v58, %v44
    %v60 = vadd.f32 %v59, %v45
    %v61 = vadd.f32 %v60, %v46
    %v62 = vadd.f32 %v61, %v47
    %v63 = vadd.f32 %v62, %v48
    %v64 = vadd.f32 %v63, %v49
    %v65 = vadd.f32 %v64, %v50
    %v66 = vadd.f32 %v65, %v51
    %v67 = vadd.f32 %v66, %v52
    %v68 = vadd.f32 %v67, %v53
    %v69 = vrot.slane %v68, 4
    %v70 = vadd.f32 %v68, %v69
    %v71 = vrot.slane %v70, 2
    %v72 = vadd.f32 %v70, %v71
    %v73 = vrot.slane %v72, 1
    %v74 = vadd.f32 %v72, %v73
    %75 = vadd.xlane.f32.xlu0 %v38
    %v76 = vpop.xlane.xlu0 %75
    %77 = vadd.xlane.f32.xlu0 %v39
    %v78 = vpop.xlane.xlu0 %77
    %79 = vadd.xlane.f32.xlu0 %v40
    %v80 = vpop.xlane.xlu0 %79
    %81 = vadd.xlane.f32.xlu0 %v41
    %v82 = vpop.xlane.xlu0 %81
    %83 = vadd.xlane.f32.xlu0 %v42
    %v84 = vpop.xlane.xlu0 %83
    %85 = vadd.xlane.f32.xlu0 %v43
    %v86 = vpop.xlane.xlu0 %85
    %87 = vadd.xlane.f32.xlu0 %v44
    %v88 = vpop.xlane.xlu0 %87
    %89 = vadd.xlane.f32.xlu0 %v45
    %v90 = vpop.xlane.xlu0 %89
    %91 = vadd.xlane.f32.xlu0 %v46
    %v92 = vpop.xlane.xlu0 %91
    %93 = vadd.xlane.f32.xlu0 %v47
    %v94 = vpop.xlane.xlu0 %93
    %95 = vadd.xlane.f32.xlu0 %v48
    %v96 = vpop.xlane.xlu0 %95
    %97 = vadd.xlane.f32.xlu0 %v49
    %v98 = vpop.xlane.xlu0 %97
    %99 = vadd.xlane.f32.xlu0 %v50
    %v100 = vpop.xlane.xlu0 %99
    %101 = vadd.xlane.f32.xlu0 %v51
    %v102 = vpop.xlane.xlu0 %101
    %103 = vadd.xlane.f32.xlu0 %v52
    %v104 = vpop.xlane.xlu0 %103
    %105 = vadd.xlane.f32.xlu0 %v53
    %v106 = vpop.xlane.xlu0 %105
    %107 = vxpose.xlu0.b32.start [1/16] %v74, 128
    %108 = vxpose.xlu0.b32.cont [2/16] 0.0, 128
    %109 = vxpose.xlu0.b32.cont [3/16] 0.0, 128
    %110 = vxpose.xlu0.b32.cont [4/16] 0.0, 128
    %111 = vxpose.xlu0.b32.cont [5/16] 0.0, 128
    %112 = vxpose.xlu0.b32.cont [6/16] 0.0, 128
    %113 = vxpose.xlu0.b32.cont [7/16] 0.0, 128
    %114 = vxpose.xlu0.b32.cont [8/16] 0.0, 128
    %115 = vxpose.xlu0.b32.cont [9/16] 0.0, 128
    %116 = vxpose.xlu0.b32.cont [10/16] 0.0, 128
    %117 = vxpose.xlu0.b32.cont [11/16] 0.0, 128
    %118 = vxpose.xlu0.b32.cont [12/16] 0.0, 128
    %119 = vxpose.xlu0.b32.cont [13/16] 0.0, 128
    %120 = vxpose.xlu0.b32.cont [14/16] 0.0, 128
    %121 = vxpose.xlu0.b32.cont [15/16] 0.0, 128
    %122 = vxpose.xlu0.b32.end [16/16] 0.0, 128
    %v123 = vpop.trf.xlu0
    %v124 = vpop.trf.xlu0
    %v125 = vpop.trf.xlu0
    %v126 = vpop.trf.xlu0
    %v127 = vpop.trf.xlu0
    %v128 = vpop.trf.xlu0
    %v129 = vpop.trf.xlu0
    %v130 = vpop.trf.xlu0
    %v131 = vpop.trf.xlu0
    %v132 = vpop.trf.xlu0
    %v133 = vpop.trf.xlu0
    %v134 = vpop.trf.xlu0
    %v135 = vpop.trf.xlu0
    %v136 = vpop.trf.xlu0
    %v137 = vpop.trf.xlu0
    %v138 = vpop.trf.xlu0
    %v139 = vmul.f32 %v123, %v76
    %v140 = vmul.f32 %v124, %v78
    %v141 = vmul.f32 %v125, %v80
    %v142 = vmul.f32 %v126, %v82
    %v143 = vmul.f32 %v127, %v84
    %v144 = vmul.f32 %v128, %v86
    %v145 = vmul.f32 %v129, %v88
    %v146 = vmul.f32 %v130, %v90
    %v147 = vmul.f32 %v131, %v92
    %v148 = vmul.f32 %v132, %v94
    %v149 = vmul.f32 %v133, %v96
    %v150 = vmul.f32 %v134, %v98
    %v151 = vmul.f32 %v135, %v100
    %v152 = vmul.f32 %v136, %v102
    %v153 = vmul.f32 %v137, %v104
    %v154 = vmul.f32 %v138, %v106
    %v155 = vrsqrt.pop %v139
    %v156 = vmul.f32 %v139, %v155
    %vm157 = vcmp.eq.f32.partialorder %v139, inf
    %v158 = vsel %vm157, %v139, %v156
    %vm159 = vcmp.eq.f32.partialorder %v139, 0.0
    %v160 = vand.u32 %v139, 2147483648
    %v161 = vsel %vm159, %v160, %v158
    %v162 = vrsqrt.pop %v140
    %v163 = vmul.f32 %v140, %v162
    %vm164 = vcmp.eq.f32.partialorder %v140, inf
    %v165 = vsel %vm164, %v140, %v163
    %vm166 = vcmp.eq.f32.partialorder %v140, 0.0
    %v167 = vand.u32 %v140, 2147483648
    %v168 = vsel %vm166, %v167, %v165
    %v169 = vrsqrt.pop %v141
    %v170 = vmul.f32 %v141, %v169
    %vm171 = vcmp.eq.f32.partialorder %v141, inf
    %v172 = vsel %vm171, %v141, %v170
    %vm173 = vcmp.eq.f32.partialorder %v141, 0.0
    %v174 = vand.u32 %v141, 2147483648
    %v175 = vsel %vm173, %v174, %v172
    %v176 = vrsqrt.pop %v142
    %v177 = vmul.f32 %v142, %v176
    %vm178 = vcmp.eq.f32.partialorder %v142, inf
    %v179 = vsel %vm178, %v142, %v177
    %vm180 = vcmp.eq.f32.partialorder %v142, 0.0
    %v181 = vand.u32 %v142, 2147483648
    %v182 = vsel %vm180, %v181, %v179
    %v183 = vrsqrt.pop %v143
    %v184 = vmul.f32 %v143, %v183
    %vm185 = vcmp.eq.f32.partialorder %v143, inf
    %v186 = vsel %vm185, %v143, %v184
    %vm187 = vcmp.eq.f32.partialorder %v143, 0.0
    %v188 = vand.u32 %v143, 2147483648
    %v189 = vsel %vm187, %v188, %v186
    %v190 = vrsqrt.pop %v144
    %v191 = vmul.f32 %v144, %v190
    %vm192 = vcmp.eq.f32.partialorder %v144, inf
    %v193 = vsel %vm192, %v144, %v191
    %vm194 = vcmp.eq.f32.partialorder %v144, 0.0
    %v195 = vand.u32 %v144, 2147483648
    %v196 = vsel %vm194, %v195, %v193
    %v197 = vrsqrt.pop %v145
    %v198 = vmul.f32 %v145, %v197
    %vm199 = vcmp.eq.f32.partialorder %v145, inf
    %v200 = vsel %vm199, %v145, %v198
    %vm201 = vcmp.eq.f32.partialorder %v145, 0.0
    %v202 = vand.u32 %v145, 2147483648
    %v203 = vsel %vm201, %v202, %v200
    %v204 = vrsqrt.pop %v146
    %v205 = vmul.f32 %v146, %v204
    %vm206 = vcmp.eq.f32.partialorder %v146, inf
    %v207 = vsel %vm206, %v146, %v205
    %vm208 = vcmp.eq.f32.partialorder %v146, 0.0
    %v209 = vand.u32 %v146, 2147483648
    %v210 = vsel %vm208, %v209, %v207
    %v211 = vrsqrt.pop %v147
    %v212 = vmul.f32 %v147, %v211
    %vm213 = vcmp.eq.f32.partialorder %v147, inf
    %v214 = vsel %vm213, %v147, %v212
    %vm215 = vcmp.eq.f32.partialorder %v147, 0.0
    %v216 = vand.u32 %v147, 2147483648
    %v217 = vsel %vm215, %v216, %v214
    %v218 = vrsqrt.pop %v148
    %v219 = vmul.f32 %v148, %v218
    %vm220 = vcmp.eq.f32.partialorder %v148, inf
    %v221 = vsel %vm220, %v148, %v219
    %vm222 = vcmp.eq.f32.partialorder %v148, 0.0
    %v223 = vand.u32 %v148, 2147483648
    %v224 = vsel %vm222, %v223, %v221
    %v225 = vrsqrt.pop %v149
    %v226 = vmul.f32 %v149, %v225
    %vm227 = vcmp.eq.f32.partialorder %v149, inf
    %v228 = vsel %vm227, %v149, %v226
    %vm229 = vcmp.eq.f32.partialorder %v149, 0.0
    %v230 = vand.u32 %v149, 2147483648
    %v231 = vsel %vm229, %v230, %v228
    %v232 = vrsqrt.pop %v150
    %v233 = vmul.f32 %v150, %v232
    %vm234 = vcmp.eq.f32.partialorder %v150, inf
    %v235 = vsel %vm234, %v150, %v233
    %vm236 = vcmp.eq.f32.partialorder %v150, 0.0
    %v237 = vand.u32 %v150, 2147483648
    %v238 = vsel %vm236, %v237, %v235
    %v239 = vrsqrt.pop %v151
    %v240 = vmul.f32 %v151, %v239
    %vm241 = vcmp.eq.f32.partialorder %v151, inf
    %v242 = vsel %vm241, %v151, %v240
    %vm243 = vcmp.eq.f32.partialorder %v151, 0.0
    %v244 = vand.u32 %v151, 2147483648
    %v245 = vsel %vm243, %v244, %v242
    %v246 = vrsqrt.pop %v152
    %v247 = vmul.f32 %v152, %v246
    %vm248 = vcmp.eq.f32.partialorder %v152, inf
    %v249 = vsel %vm248, %v152, %v247
    %vm250 = vcmp.eq.f32.partialorder %v152, 0.0
    %v251 = vand.u32 %v152, 2147483648
    %v252 = vsel %vm250, %v251, %v249
    %v253 = vrsqrt.pop %v153
    %v254 = vmul.f32 %v153, %v253
    %vm255 = vcmp.eq.f32.partialorder %v153, inf
    %v256 = vsel %vm255, %v153, %v254
    %vm257 = vcmp.eq.f32.partialorder %v153, 0.0
    %v258 = vand.u32 %v153, 2147483648
    %v259 = vsel %vm257, %v258, %v256
    %v260 = vrsqrt.pop %v154
    %v261 = vmul.f32 %v154, %v260
    %vm262 = vcmp.eq.f32.partialorder %v154, inf
    %v263 = vsel %vm262, %v154, %v261
    %vm264 = vcmp.eq.f32.partialorder %v154, 0.0
    %v265 = vand.u32 %v154, 2147483648
    %v266 = vsel %vm264, %v265, %v263
    %v267 = vld [vmem:[%s0] sm:$0xff]
    %v268 = vld [vmem:[%s0 + $0x8] sm:$0xff]
    %v269 = vld [vmem:[%s0 + $0x10] sm:$0xff]
    %v270 = vld [vmem:[%s0 + $0x18] sm:$0xff]
    %v271 = vld [vmem:[%s0 + $0x20] sm:$0xff]
    %v272 = vld [vmem:[%s0 + $0x28] sm:$0xff]
    %v273 = vld [vmem:[%s0 + $0x30] sm:$0xff]
    %v274 = vld [vmem:[%s0 + $0x38] sm:$0xff]
    %v275 = vld [vmem:[%s0 + $0x40] sm:$0xff]
    %v276 = vld [vmem:[%s0 + $0x48] sm:$0xff]
    %v277 = vld [vmem:[%s0 + $0x50] sm:$0xff]
    %v278 = vld [vmem:[%s0 + $0x58] sm:$0xff]
    %v279 = vld [vmem:[%s0 + $0x60] sm:$0xff]
    %v280 = vld [vmem:[%s0 + $0x68] sm:$0xff]
    %v281 = vld [vmem:[%s0 + $0x70] sm:$0xff]
    %v282 = vld [vmem:[%s0 + $0x78] sm:$0xff]
    %v283 = vld [vmem:[%s2] sm:$0xff]
    %v284 = vld [vmem:[%s2 + $0x8] sm:$0xff]
    %v285 = vld [vmem:[%s2 + $0x10] sm:$0xff]
    %v286 = vld [vmem:[%s2 + $0x18] sm:$0xff]
    %v287 = vld [vmem:[%s3] sm:$0x1]
    %v289 = vlaneseq
    %v290 = vshrl.u32 %v289, 7
    %v291 = vsub.s32 0, %v290
    %v292 = vrot.slane %v287, %v291
    %vm294 = vcmask 261120
    %v296 = vsel %vm294, %v267, 0
    %v299 = vsel %vm294, %v268, 0
    %v302 = vsel %vm294, %v269, 0
    %v305 = vsel %vm294, %v270, 0
    %v308 = vsel %vm294, %v271, 0
    %v311 = vsel %vm294, %v272, 0
    %v314 = vsel %vm294, %v273, 0
    %v317 = vsel %vm294, %v274, 0
    %v320 = vsel %vm294, %v275, 0
    %v323 = vsel %vm294, %v276, 0
    %v326 = vsel %vm294, %v277, 0
    %v329 = vsel %vm294, %v278, 0
    %v332 = vsel %vm294, %v279, 0
    %v335 = vsel %vm294, %v280, 0
    %v338 = vsel %vm294, %v281, 0
    %v341 = vsel %vm294, %v282, 0
    %343 = vmatprep.subr.mxu0 0.0
    %344 = vmatpush1.msra.mxu0 0.0
    %345 = vmatprep.subr.mxu0 0.0
    %346 = vmatpush1.msra.mxu0 0.0
    %347 = vmatprep.subr.mxu0 0.0
    %348 = vmatpush1.msra.mxu0 0.0
    %349 = vmatprep.subr.mxu0 0.0
    %350 = vmatpush1.msra.mxu0 0.0
    %351 = vmatprep.subr.mxu0 0.0
    %352 = vmatpush1.msra.mxu0 0.0
    %353 = vmatprep.subr.mxu0 0.0
    %354 = vmatpush1.msra.mxu0 0.0
    %355 = vmatprep.subr.mxu0 0.0
    %356 = vmatpush1.msra.mxu0 0.0
    %357 = vmatprep.subr.mxu0 0.0
    %358 = vmatpush1.msra.mxu0 0.0
    %359 = vmatprep.subr.mxu0 0.0
    %360 = vmatpush1.msra.mxu0 0.0
    %361 = vmatprep.subr.mxu0 0.0
    %362 = vmatpush1.msra.mxu0 0.0
    %363 = vmatprep.subr.mxu0 0.0
    %364 = vmatpush1.msra.mxu0 0.0
    %365 = vmatprep.subr.mxu0 0.0
    %366 = vmatpush1.msra.mxu0 0.0
    %367 = vmatprep.subr.mxu0 0.0
    %368 = vmatpush1.msra.mxu0 %v286
    %369 = vmatprep.subr.mxu0 0.0
    %370 = vmatpush1.msra.mxu0 %v285
    %371 = vmatprep.subr.mxu0 0.0
    %372 = vmatpush1.msra.mxu0 %v284
    %373 = vmatprep.subr.mxu0 0.0
    %374 = vmatpush1.msra.mxu0 %v283
    %375 = vmatprep.subr.mxu0 0.0
    %376 = vmatpush2.msra.mxu0 0.0
    %377 = vmatprep.subr.mxu0 0.0
    %378 = vmatpush2.msra.mxu0 0.0
    %379 = vmatprep.subr.mxu0 0.0
    %380 = vmatpush2.msra.mxu0 0.0
    %381 = vmatprep.subr.mxu0 0.0
    %382 = vmatpush2.msra.mxu0 0.0
    %383 = vmatprep.subr.mxu0 0.0
    %384 = vmatpush2.msra.mxu0 0.0
    %385 = vmatprep.subr.mxu0 0.0
    %386 = vmatpush2.msra.mxu0 0.0
    %387 = vmatprep.subr.mxu0 0.0
    %388 = vmatpush2.msra.mxu0 0.0
    %389 = vmatprep.subr.mxu0 0.0
    %390 = vmatpush2.msra.mxu0 0.0
    %391 = vmatprep.subr.mxu0 0.0
    %392 = vmatpush2.msra.mxu0 0.0
    %393 = vmatprep.subr.mxu0 0.0
    %394 = vmatpush2.msra.mxu0 0.0
    %395 = vmatprep.subr.mxu0 0.0
    %396 = vmatpush2.msra.mxu0 0.0
    %397 = vmatprep.subr.mxu0 0.0
    %398 = vmatpush2.msra.mxu0 0.0
    %399 = vmatprep.subr.mxu0 0.0
    %400 = vmatpush2.msra.mxu0 0.0
    %401 = vmatprep.subr.mxu0 0.0
    %402 = vmatpush2.msra.mxu0 0.0
    %403 = vmatprep.subr.mxu0 0.0
    %404 = vmatpush2.msra.mxu0 0.0
    %405 = vmatprep.subr.mxu0 0.0
    %406 = vmatpush2.msra.mxu0 0.0
    %407 = vmatprep.mubr.f32.mxu0 0.0
    %408 = vmatmul.mubr.f32.gmra.mxu0 %v296
    %v409 = vpop.f32.mrf.mxu0
    %v410 = vadd.f32 %v292, %v409
    %v411 = vpop.f32.mrf.mxu0
    %412 = vmatprep.mubr.f32.mxu0 0.0
    %413 = vmatmul.mubr.f32.gmra.mxu0 %v299
    %v414 = vpop.f32.mrf.mxu0
    %v415 = vadd.f32 %v292, %v414
    %v416 = vpop.f32.mrf.mxu0
    %417 = vmatprep.mubr.f32.mxu0 0.0
    %418 = vmatmul.mubr.f32.gmra.mxu0 %v302
    %v419 = vpop.f32.mrf.mxu0
    %v420 = vadd.f32 %v292, %v419
    %v421 = vpop.f32.mrf.mxu0
    %422 = vmatprep.mubr.f32.mxu0 0.0
    %423 = vmatmul.mubr.f32.gmra.mxu0 %v305
    %v424 = vpop.f32.mrf.mxu0
    %v425 = vadd.f32 %v292, %v424
    %v426 = vpop.f32.mrf.mxu0
    %427 = vmatprep.mubr.f32.mxu0 0.0
    %428 = vmatmul.mubr.f32.gmra.mxu0 %v308
    %v429 = vpop.f32.mrf.mxu0
    %v430 = vadd.f32 %v292, %v429
    %v431 = vpop.f32.mrf.mxu0
    %432 = vmatprep.mubr.f32.mxu0 0.0
    %433 = vmatmul.mubr.f32.gmra.mxu0 %v311
    %v434 = vpop.f32.mrf.mxu0
    %v435 = vadd.f32 %v292, %v434
    %v436 = vpop.f32.mrf.mxu0
    %437 = vmatprep.mubr.f32.mxu0 0.0
    %438 = vmatmul.mubr.f32.gmra.mxu0 %v314
    %v439 = vpop.f32.mrf.mxu0
    %v440 = vadd.f32 %v292, %v439
    %v441 = vpop.f32.mrf.mxu0
    %442 = vmatprep.mubr.f32.mxu0 0.0
    %443 = vmatmul.mubr.f32.gmra.mxu0 %v317
    %v444 = vpop.f32.mrf.mxu0
    %v445 = vadd.f32 %v292, %v444
    %v446 = vpop.f32.mrf.mxu0
    %447 = vmatprep.mubr.f32.mxu0 0.0
    %448 = vmatmul.mubr.f32.gmra.mxu0 %v320
    %v449 = vpop.f32.mrf.mxu0
    %v450 = vadd.f32 %v292, %v449
    %v451 = vpop.f32.mrf.mxu0
    %452 = vmatprep.mubr.f32.mxu0 0.0
    %453 = vmatmul.mubr.f32.gmra.mxu0 %v323
    %v454 = vpop.f32.mrf.mxu0
    %v455 = vadd.f32 %v292, %v454
    %v456 = vpop.f32.mrf.mxu0
    %457 = vmatprep.mubr.f32.mxu0 0.0
    %458 = vmatmul.mubr.f32.gmra.mxu0 %v326
    %v459 = vpop.f32.mrf.mxu0
    %v460 = vadd.f32 %v292, %v459
    %v461 = vpop.f32.mrf.mxu0
    %462 = vmatprep.mubr.f32.mxu0 0.0
    %463 = vmatmul.mubr.f32.gmra.mxu0 %v329
    %v464 = vpop.f32.mrf.mxu0
    %v465 = vadd.f32 %v292, %v464
    %v466 = vpop.f32.mrf.mxu0
    %467 = vmatprep.mubr.f32.mxu0 0.0
    %468 = vmatmul.mubr.f32.gmra.mxu0 %v332
    %v469 = vpop.f32.mrf.mxu0
    %v470 = vadd.f32 %v292, %v469
    %v471 = vpop.f32.mrf.mxu0
    %472 = vmatprep.mubr.f32.mxu0 0.0
    %473 = vmatmul.mubr.f32.gmra.mxu0 %v335
    %v474 = vpop.f32.mrf.mxu0
    %v475 = vadd.f32 %v292, %v474
    %v476 = vpop.f32.mrf.mxu0
    %477 = vmatprep.mubr.f32.mxu0 0.0
    %478 = vmatmul.mubr.f32.gmra.mxu0 %v338
    %v479 = vpop.f32.mrf.mxu0
    %v480 = vadd.f32 %v292, %v479
    %v481 = vpop.f32.mrf.mxu0
    %482 = vmatprep.mubr.f32.mxu0 0.0
    %483 = vmatmul.mubr.f32.gmra.mxu0 %v341
    %v484 = vpop.f32.mrf.mxu0
    %v485 = vadd.f32 %v292, %v484
    %v486 = vpop.f32.mrf.mxu0
    %487 = vdwg.mxu0
    %489 = vset.pattern.permute.xlu0 0
    %490 = vperm.xlu0 %489, %v161
    %v491 = vpop.permute.xlu0 %490
    %494 = vset.pattern.permute.xlu0 0
    %495 = vperm.xlu0 %494, %v168
    %v496 = vpop.permute.xlu0 %495
    %499 = vset.pattern.permute.xlu0 0
    %500 = vperm.xlu0 %499, %v175
    %v501 = vpop.permute.xlu0 %500
    %504 = vset.pattern.permute.xlu0 0
    %505 = vperm.xlu0 %504, %v182
    %v506 = vpop.permute.xlu0 %505
    %509 = vset.pattern.permute.xlu0 0
    %510 = vperm.xlu0 %509, %v189
    %v511 = vpop.permute.xlu0 %510
    %514 = vset.pattern.permute.xlu0 0
    %515 = vperm.xlu0 %514, %v196
    %v516 = vpop.permute.xlu0 %515
    %519 = vset.pattern.permute.xlu0 0
    %520 = vperm.xlu0 %519, %v203
    %v521 = vpop.permute.xlu0 %520
    %524 = vset.pattern.permute.xlu0 0
    %525 = vperm.xlu0 %524, %v210
    %v526 = vpop.permute.xlu0 %525
    %529 = vset.pattern.permute.xlu0 0
    %530 = vperm.xlu0 %529, %v217
    %v531 = vpop.permute.xlu0 %530
    %534 = vset.pattern.permute.xlu0 0
    %535 = vperm.xlu0 %534, %v224
    %v536 = vpop.permute.xlu0 %535
    %539 = vset.pattern.permute.xlu0 0
    %540 = vperm.xlu0 %539, %v231
    %v541 = vpop.permute.xlu0 %540
    %544 = vset.pattern.permute.xlu0 0
    %545 = vperm.xlu0 %544, %v238
    %v546 = vpop.permute.xlu0 %545
    %549 = vset.pattern.permute.xlu0 0
    %550 = vperm.xlu0 %549, %v245
    %v551 = vpop.permute.xlu0 %550
    %554 = vset.pattern.permute.xlu0 0
    %555 = vperm.xlu0 %554, %v252
    %v556 = vpop.permute.xlu0 %555
    %559 = vset.pattern.permute.xlu0 0
    %560 = vperm.xlu0 %559, %v259
    %v561 = vpop.permute.xlu0 %560
    %564 = vset.pattern.permute.xlu0 0
    %565 = vperm.xlu0 %564, %v266
    %v566 = vpop.permute.xlu0 %565
    %v568 = vmul.f32 %v491, %v410
    %v569 = vmul.f32 %v496, %v415
    %v570 = vmul.f32 %v501, %v420
    %v571 = vmul.f32 %v506, %v425
    %v572 = vmul.f32 %v511, %v430
    %v573 = vmul.f32 %v516, %v435
    %v574 = vmul.f32 %v521, %v440
    %v575 = vmul.f32 %v526, %v445
    %v576 = vmul.f32 %v531, %v450
    %v577 = vmul.f32 %v536, %v455
    %v578 = vmul.f32 %v541, %v460
    %v579 = vmul.f32 %v546, %v465
    %v580 = vmul.f32 %v551, %v470
    %v581 = vmul.f32 %v556, %v475
    %v582 = vmul.f32 %v561, %v480
    %v583 = vmul.f32 %v566, %v485
    %584 = vmatprep.subr.mxu0 0.0
    %585 = vmatpush1.msra.mxu0 %v583
    %586 = vmatprep.subr.mxu0 0.0
    %587 = vmatpush1.msra.mxu0 %v582
    %588 = vmatprep.subr.mxu0 0.0
    %589 = vmatpush1.msra.mxu0 %v581
    %590 = vmatprep.subr.mxu0 0.0
    %591 = vmatpush1.msra.mxu0 %v580
    %592 = vmatprep.subr.mxu0 0.0
    %593 = vmatpush1.msra.mxu0 %v579
    %594 = vmatprep.subr.mxu0 0.0
    %595 = vmatpush1.msra.mxu0 %v578
    %596 = vmatprep.subr.mxu0 0.0
    %597 = vmatpush1.msra.mxu0 %v577
    %598 = vmatprep.subr.mxu0 0.0
    %599 = vmatpush1.msra.mxu0 %v576
    %600 = vmatprep.subr.mxu0 0.0
    %601 = vmatpush1.msra.mxu0 %v575
    %602 = vmatprep.subr.mxu0 0.0
    %603 = vmatpush1.msra.mxu0 %v574
    %604 = vmatprep.subr.mxu0 0.0
    %605 = vmatpush1.msra.mxu0 %v573
    %606 = vmatprep.subr.mxu0 0.0
    %607 = vmatpush1.msra.mxu0 %v572
    %608 = vmatprep.subr.mxu0 0.0
    %609 = vmatpush1.msra.mxu0 %v571
    %610 = vmatprep.subr.mxu0 0.0
    %611 = vmatpush1.msra.mxu0 %v570
    %612 = vmatprep.subr.mxu0 0.0
    %613 = vmatpush1.msra.mxu0 %v569
    %614 = vmatprep.subr.mxu0 0.0
    %615 = vmatpush1.msra.mxu0 %v568
    %616 = vmatprep.subr.mxu0 0.0
    %617 = vmatpush2.msra.mxu0 0.0
    %618 = vmatprep.subr.mxu0 0.0
    %619 = vmatpush2.msra.mxu0 0.0
    %620 = vmatprep.subr.mxu0 0.0
    %621 = vmatpush2.msra.mxu0 0.0
    %622 = vmatprep.subr.mxu0 0.0
    %623 = vmatpush2.msra.mxu0 0.0
    %624 = vmatprep.subr.mxu0 0.0
    %625 = vmatpush2.msra.mxu0 0.0
    %626 = vmatprep.subr.mxu0 0.0
    %627 = vmatpush2.msra.mxu0 0.0
    %628 = vmatprep.subr.mxu0 0.0
    %629 = vmatpush2.msra.mxu0 0.0
    %630 = vmatprep.subr.mxu0 0.0
    %631 = vmatpush2.msra.mxu0 0.0
    %632 = vmatprep.subr.mxu0 0.0
    %633 = vmatpush2.msra.mxu0 0.0
    %634 = vmatprep.subr.mxu0 0.0
    %635 = vmatpush2.msra.mxu0 0.0
    %636 = vmatprep.subr.mxu0 0.0
    %637 = vmatpush2.msra.mxu0 0.0
    %638 = vmatprep.subr.mxu0 0.0
    %639 = vmatpush2.msra.mxu0 0.0
    %640 = vmatprep.subr.mxu0 0.0
    %641 = vmatpush2.msra.mxu0 0.0
    %642 = vmatprep.subr.mxu0 0.0
    %643 = vmatpush2.msra.mxu0 0.0
    %644 = vmatprep.subr.mxu0 0.0
    %645 = vmatpush2.msra.mxu0 0.0
    %646 = vmatprep.subr.mxu0 0.0
    %647 = vmatpush2.msra.mxu0 0.0
    %648 = vmatprep.mubr.f32.mxu0 0.0
    %649 = vmatmul.mubr.f32.gmra.mxu0 %v38
    %v650 = vpop.f32.mrf.mxu0
    %v651 = vadd.f32 0.0, %v650
    %v652 = vpop.f32.mrf.mxu0
    %653 = vmatprep.mubr.f32.mxu0 0.0
    %654 = vmatmul.mubr.f32.gmra.mxu0 %v39
    %v655 = vpop.f32.mrf.mxu0
    %v656 = vadd.f32 0.0, %v655
    %v657 = vpop.f32.mrf.mxu0
    %658 = vmatprep.mubr.f32.mxu0 0.0
    %659 = vmatmul.mubr.f32.gmra.mxu0 %v40
    %v660 = vpop.f32.mrf.mxu0
    %v661 = vadd.f32 0.0, %v660
    %v662 = vpop.f32.mrf.mxu0
    %663 = vmatprep.mubr.f32.mxu0 0.0
    %664 = vmatmul.mubr.f32.gmra.mxu0 %v41
    %v665 = vpop.f32.mrf.mxu0
    %v666 = vadd.f32 0.0, %v665
    %v667 = vpop.f32.mrf.mxu0
    %668 = vmatprep.mubr.f32.mxu0 0.0
    %669 = vmatmul.mubr.f32.gmra.mxu0 %v42
    %v670 = vpop.f32.mrf.mxu0
    %v671 = vadd.f32 0.0, %v670
    %v672 = vpop.f32.mrf.mxu0
    %673 = vmatprep.mubr.f32.mxu0 0.0
    %674 = vmatmul.mubr.f32.gmra.mxu0 %v43
    %v675 = vpop.f32.mrf.mxu0
    %v676 = vadd.f32 0.0, %v675
    %v677 = vpop.f32.mrf.mxu0
    %678 = vmatprep.mubr.f32.mxu0 0.0
    %679 = vmatmul.mubr.f32.gmra.mxu0 %v44
    %v680 = vpop.f32.mrf.mxu0
    %v681 = vadd.f32 0.0, %v680
    %v682 = vpop.f32.mrf.mxu0
    %683 = vmatprep.mubr.f32.mxu0 0.0
    %684 = vmatmul.mubr.f32.gmra.mxu0 %v45
    %v685 = vpop.f32.mrf.mxu0
    %v686 = vadd.f32 0.0, %v685
    %v687 = vpop.f32.mrf.mxu0
    %688 = vmatprep.mubr.f32.mxu0 0.0
    %689 = vmatmul.mubr.f32.gmra.mxu0 %v46
    %v690 = vpop.f32.mrf.mxu0
    %v691 = vadd.f32 0.0, %v690
    %v692 = vpop.f32.mrf.mxu0
    %693 = vmatprep.mubr.f32.mxu0 0.0
    %694 = vmatmul.mubr.f32.gmra.mxu0 %v47
    %v695 = vpop.f32.mrf.mxu0
    %v696 = vadd.f32 0.0, %v695
    %v697 = vpop.f32.mrf.mxu0
    %698 = vmatprep.mubr.f32.mxu0 0.0
    %699 = vmatmul.mubr.f32.gmra.mxu0 %v48
    %v700 = vpop.f32.mrf.mxu0
    %v701 = vadd.f32 0.0, %v700
    %v702 = vpop.f32.mrf.mxu0
    %703 = vmatprep.mubr.f32.mxu0 0.0
    %704 = vmatmul.mubr.f32.gmra.mxu0 %v49
    %v705 = vpop.f32.mrf.mxu0
    %v706 = vadd.f32 0.0, %v705
    %v707 = vpop.f32.mrf.mxu0
    %708 = vmatprep.mubr.f32.mxu0 0.0
    %709 = vmatmul.mubr.f32.gmra.mxu0 %v50
    %v710 = vpop.f32.mrf.mxu0
    %v711 = vadd.f32 0.0, %v710
    %v712 = vpop.f32.mrf.mxu0
    %713 = vmatprep.mubr.f32.mxu0 0.0
    %714 = vmatmul.mubr.f32.gmra.mxu0 %v51
    %v715 = vpop.f32.mrf.mxu0
    %v716 = vadd.f32 0.0, %v715
    %v717 = vpop.f32.mrf.mxu0
    %718 = vmatprep.mubr.f32.mxu0 0.0
    %719 = vmatmul.mubr.f32.gmra.mxu0 %v52
    %v720 = vpop.f32.mrf.mxu0
    %v721 = vadd.f32 0.0, %v720
    %v722 = vpop.f32.mrf.mxu0
    %723 = vmatprep.mubr.f32.mxu0 0.0
    %724 = vmatmul.mubr.f32.gmra.mxu0 %v53
    %v725 = vpop.f32.mrf.mxu0
    %v726 = vadd.f32 0.0, %v725
    %v727 = vpop.f32.mrf.mxu0
    %728 = vdwg.mxu0
    %v729 = vmax.f32 %v651, 0.0
    %v730 = vmax.f32 %v656, 0.0
    %v731 = vmax.f32 %v661, 0.0
    %v732 = vmax.f32 %v666, 0.0
    %v733 = vmax.f32 %v671, 0.0
    %v734 = vmax.f32 %v676, 0.0
    %v735 = vmax.f32 %v681, 0.0
    %v736 = vmax.f32 %v686, 0.0
    %v737 = vmax.f32 %v691, 0.0
    %v738 = vmax.f32 %v696, 0.0
    %v739 = vmax.f32 %v701, 0.0
    %v740 = vmax.f32 %v706, 0.0
    %v741 = vmax.f32 %v711, 0.0
    %v742 = vmax.f32 %v716, 0.0
    %v743 = vmax.f32 %v721, 0.0
    %v744 = vmax.f32 %v726, 0.0
    %v745 = vld [vmem:[#allocation2] sm:$0xff]
    %v746 = vld [vmem:[#allocation2 + $0x8] sm:$0xff]
    %v747 = vld [vmem:[#allocation2 + $0x10] sm:$0xff]
    %v748 = vld [vmem:[#allocation2 + $0x18] sm:$0xff]
    %v749 = vld [vmem:[#allocation2 + $0x20] sm:$0xff]
    %v750 = vld [vmem:[#allocation2 + $0x28] sm:$0xff]
    %v751 = vld [vmem:[#allocation2 + $0x30] sm:$0xff]
    %v752 = vld [vmem:[#allocation2 + $0x38] sm:$0xff]
    %v753 = vld [vmem:[#allocation2 + $0x40] sm:$0xff]
    %v754 = vld [vmem:[#allocation2 + $0x48] sm:$0xff]
    %v755 = vld [vmem:[#allocation2 + $0x50] sm:$0xff]
    %v756 = vld [vmem:[#allocation2 + $0x58] sm:$0xff]
    %v757 = vld [vmem:[#allocation2 + $0x60] sm:$0xff]
    %v758 = vld [vmem:[#allocation2 + $0x68] sm:$0xff]
    %v759 = vld [vmem:[#allocation2 + $0x70] sm:$0xff]
    %v760 = vld [vmem:[#allocation2 + $0x78] sm:$0xff]
    %v761 = vld [vmem:[%s5] sm:$0x1]
    %v763 = vlaneseq
    %v764 = vshrl.u32 %v763, 7
    %v765 = vsub.s32 0, %v764
    %v766 = vrot.slane %v761, %v765
    %768 = vmatprep.subr.mxu0 0.0
    %769 = vmatpush1.msra.mxu0 %v760
    %770 = vmatprep.subr.mxu0 0.0
    %771 = vmatpush1.msra.mxu0 %v759
    %772 = vmatprep.subr.mxu0 0.0
    %773 = vmatpush1.msra.mxu0 %v758
    %774 = vmatprep.subr.mxu0 0.0
    %775 = vmatpush1.msra.mxu0 %v757
    %776 = vmatprep.subr.mxu0 0.0
    %777 = vmatpush1.msra.mxu0 %v756
    %778 = vmatprep.subr.mxu0 0.0
    %779 = vmatpush1.msra.mxu0 %v755
    %780 = vmatprep.subr.mxu0 0.0
    %781 = vmatpush1.msra.mxu0 %v754
    %782 = vmatprep.subr.mxu0 0.0
    %783 = vmatpush1.msra.mxu0 %v753
    %784 = vmatprep.subr.mxu0 0.0
    %785 = vmatpush1.msra.mxu0 %v752
    %786 = vmatprep.subr.mxu0 0.0
    %787 = vmatpush1.msra.mxu0 %v751
    %788 = vmatprep.subr.mxu0 0.0
    %789 = vmatpush1.msra.mxu0 %v750
    %790 = vmatprep.subr.mxu0 0.0
    %791 = vmatpush1.msra.mxu0 %v749
    %792 = vmatprep.subr.mxu0 0.0
    %793 = vmatpush1.msra.mxu0 %v748
    %794 = vmatprep.subr.mxu0 0.0
    %795 = vmatpush1.msra.mxu0 %v747
    %796 = vmatprep.subr.mxu0 0.0
    %797 = vmatpush1.msra.mxu0 %v746
    %798 = vmatprep.subr.mxu0 0.0
    %799 = vmatpush1.msra.mxu0 %v745
    %800 = vmatprep.subr.mxu0 0.0
    %801 = vmatpush2.msra.mxu0 0.0
    %802 = vmatprep.subr.mxu0 0.0
    %803 = vmatpush2.msra.mxu0 0.0
    %804 = vmatprep.subr.mxu0 0.0
    %805 = vmatpush2.msra.mxu0 0.0
    %806 = vmatprep.subr.mxu0 0.0
    %807 = vmatpush2.msra.mxu0 0.0
    %808 = vmatprep.subr.mxu0 0.0
    %809 = vmatpush2.msra.mxu0 0.0
    %810 = vmatprep.subr.mxu0 0.0
    %811 = vmatpush2.msra.mxu0 0.0
    %812 = vmatprep.subr.mxu0 0.0
    %813 = vmatpush2.msra.mxu0 0.0
    %814 = vmatprep.subr.mxu0 0.0
    %815 = vmatpush2.msra.mxu0 0.0
    %816 = vmatprep.subr.mxu0 0.0
    %817 = vmatpush2.msra.mxu0 0.0
    %818 = vmatprep.subr.mxu0 0.0
    %819 = vmatpush2.msra.mxu0 0.0
    %820 = vmatprep.subr.mxu0 0.0
    %821 = vmatpush2.msra.mxu0 0.0
    %822 = vmatprep.subr.mxu0 0.0
    %823 = vmatpush2.msra.mxu0 0.0
    %824 = vmatprep.subr.mxu0 0.0
    %825 = vmatpush2.msra.mxu0 0.0
    %826 = vmatprep.subr.mxu0 0.0
    %827 = vmatpush2.msra.mxu0 0.0
    %828 = vmatprep.subr.mxu0 0.0
    %829 = vmatpush2.msra.mxu0 0.0
    %830 = vmatprep.subr.mxu0 0.0
    %831 = vmatpush2.msra.mxu0 0.0
    %832 = vmatprep.mubr.f32.mxu0 0.0
    %833 = vmatmul.mubr.f32.gmra.mxu0 %v729
    %v834 = vpop.f32.mrf.mxu0
    %v835 = vadd.f32 %v766, %v834
    %v836 = vpop.f32.mrf.mxu0
    %837 = vmatprep.mubr.f32.mxu0 0.0
    %838 = vmatmul.mubr.f32.gmra.mxu0 %v730
    %v839 = vpop.f32.mrf.mxu0
    %v840 = vadd.f32 %v766, %v839
    %v841 = vpop.f32.mrf.mxu0
    %842 = vmatprep.mubr.f32.mxu0 0.0
    %843 = vmatmul.mubr.f32.gmra.mxu0 %v731
    %v844 = vpop.f32.mrf.mxu0
    %v845 = vadd.f32 %v766, %v844
    %v846 = vpop.f32.mrf.mxu0
    %847 = vmatprep.mubr.f32.mxu0 0.0
    %848 = vmatmul.mubr.f32.gmra.mxu0 %v732
    %v849 = vpop.f32.mrf.mxu0
    %v850 = vadd.f32 %v766, %v849
    %v851 = vpop.f32.mrf.mxu0
    %852 = vmatprep.mubr.f32.mxu0 0.0
    %853 = vmatmul.mubr.f32.gmra.mxu0 %v733
    %v854 = vpop.f32.mrf.mxu0
    %v855 = vadd.f32 %v766, %v854
    %v856 = vpop.f32.mrf.mxu0
    %857 = vmatprep.mubr.f32.mxu0 0.0
    %858 = vmatmul.mubr.f32.gmra.mxu0 %v734
    %v859 = vpop.f32.mrf.mxu0
    %v860 = vadd.f32 %v766, %v859
    %v861 = vpop.f32.mrf.mxu0
    %862 = vmatprep.mubr.f32.mxu0 0.0
    %863 = vmatmul.mubr.f32.gmra.mxu0 %v735
    %v864 = vpop.f32.mrf.mxu0
    %v865 = vadd.f32 %v766, %v864
    %v866 = vpop.f32.mrf.mxu0
    %867 = vmatprep.mubr.f32.mxu0 0.0
    %868 = vmatmul.mubr.f32.gmra.mxu0 %v736
    %v869 = vpop.f32.mrf.mxu0
    %v870 = vadd.f32 %v766, %v869
    %v871 = vpop.f32.mrf.mxu0
    %872 = vmatprep.mubr.f32.mxu0 0.0
    %873 = vmatmul.mubr.f32.gmra.mxu0 %v737
    %v874 = vpop.f32.mrf.mxu0
    %v875 = vadd.f32 %v766, %v874
    %v876 = vpop.f32.mrf.mxu0
    %877 = vmatprep.mubr.f32.mxu0 0.0
    %878 = vmatmul.mubr.f32.gmra.mxu0 %v738
    %v879 = vpop.f32.mrf.mxu0
    %v880 = vadd.f32 %v766, %v879
    %v881 = vpop.f32.mrf.mxu0
    %882 = vmatprep.mubr.f32.mxu0 0.0
    %883 = vmatmul.mubr.f32.gmra.mxu0 %v739
    %v884 = vpop.f32.mrf.mxu0
    %v885 = vadd.f32 %v766, %v884
    %v886 = vpop.f32.mrf.mxu0
    %887 = vmatprep.mubr.f32.mxu0 0.0
    %888 = vmatmul.mubr.f32.gmra.mxu0 %v740
    %v889 = vpop.f32.mrf.mxu0
    %v890 = vadd.f32 %v766, %v889
    %v891 = vpop.f32.mrf.mxu0
    %892 = vmatprep.mubr.f32.mxu0 0.0
    %893 = vmatmul.mubr.f32.gmra.mxu0 %v741
    %v894 = vpop.f32.mrf.mxu0
    %v895 = vadd.f32 %v766, %v894
    %v896 = vpop.f32.mrf.mxu0
    %897 = vmatprep.mubr.f32.mxu0 0.0
    %898 = vmatmul.mubr.f32.gmra.mxu0 %v742
    %v899 = vpop.f32.mrf.mxu0
    %v900 = vadd.f32 %v766, %v899
    %v901 = vpop.f32.mrf.mxu0
    %902 = vmatprep.mubr.f32.mxu0 0.0
    %903 = vmatmul.mubr.f32.gmra.mxu0 %v743
    %v904 = vpop.f32.mrf.mxu0
    %v905 = vadd.f32 %v766, %v904
    %v906 = vpop.f32.mrf.mxu0
    %907 = vmatprep.mubr.f32.mxu0 0.0
    %908 = vmatmul.mubr.f32.gmra.mxu0 %v744
    %v909 = vpop.f32.mrf.mxu0
    %v910 = vadd.f32 %v766, %v909
    %v911 = vpop.f32.mrf.mxu0
    %912 = vdwg.mxu0
    %v913 = vmul.f32 %v491, %v835
    %v914 = vmul.f32 %v496, %v840
    %v915 = vmul.f32 %v501, %v845
    %v916 = vmul.f32 %v506, %v850
    %v917 = vmul.f32 %v511, %v855
    %v918 = vmul.f32 %v516, %v860
    %v919 = vmul.f32 %v521, %v865
    %v920 = vmul.f32 %v526, %v870
    %v921 = vmul.f32 %v531, %v875
    %v922 = vmul.f32 %v536, %v880
    %v923 = vmul.f32 %v541, %v885
    %v924 = vmul.f32 %v546, %v890
    %v925 = vmul.f32 %v551, %v895
    %v926 = vmul.f32 %v556, %v900
    %v927 = vmul.f32 %v561, %v905
    %v928 = vmul.f32 %v566, %v910
    %929 = vmatprep.subr.mxu0 0.0
    %930 = vmatpush1.msra.mxu0 %v928
    %931 = vmatprep.subr.mxu0 0.0
    %932 = vmatpush1.msra.mxu0 %v927
    %933 = vmatprep.subr.mxu0 0.0
    %934 = vmatpush1.msra.mxu0 %v926
    %935 = vmatprep.subr.mxu0 0.0
    %936 = vmatpush1.msra.mxu0 %v925
    %937 = vmatprep.subr.mxu0 0.0
    %938 = vmatpush1.msra.mxu0 %v924
    %939 = vmatprep.subr.mxu0 0.0
    %940 = vmatpush1.msra.mxu0 %v923
    %941 = vmatprep.subr.mxu0 0.0
    %942 = vmatpush1.msra.mxu0 %v922
    %943 = vmatprep.subr.mxu0 0.0
    %944 = vmatpush1.msra.mxu0 %v921
    %945 = vmatprep.subr.mxu0 0.0
    %946 = vmatpush1.msra.mxu0 %v920
    %947 = vmatprep.subr.mxu0 0.0
    %948 = vmatpush1.msra.mxu0 %v919
    %949 = vmatprep.subr.mxu0 0.0
    %950 = vmatpush1.msra.mxu0 %v918
    %951 = vmatprep.subr.mxu0 0.0
    %952 = vmatpush1.msra.mxu0 %v917
    %953 = vmatprep.subr.mxu0 0.0
    %954 = vmatpush1.msra.mxu0 %v916
    %955 = vmatprep.subr.mxu0 0.0
    %956 = vmatpush1.msra.mxu0 %v915
    %957 = vmatprep.subr.mxu0 0.0
    %958 = vmatpush1.msra.mxu0 %v914
    %959 = vmatprep.subr.mxu0 0.0
    %960 = vmatpush1.msra.mxu0 %v913
    %961 = vmatprep.subr.mxu0 0.0
    %962 = vmatpush2.msra.mxu0 0.0
    %963 = vmatprep.subr.mxu0 0.0
    %964 = vmatpush2.msra.mxu0 0.0
    %965 = vmatprep.subr.mxu0 0.0
    %966 = vmatpush2.msra.mxu0 0.0
    %967 = vmatprep.subr.mxu0 0.0
    %968 = vmatpush2.msra.mxu0 0.0
    %969 = vmatprep.subr.mxu0 0.0
    %970 = vmatpush2.msra.mxu0 0.0
    %971 = vmatprep.subr.mxu0 0.0
    %972 = vmatpush2.msra.mxu0 0.0
    %973 = vmatprep.subr.mxu0 0.0
    %974 = vmatpush2.msra.mxu0 0.0
    %975 = vmatprep.subr.mxu0 0.0
    %976 = vmatpush2.msra.mxu0 0.0
    %977 = vmatprep.subr.mxu0 0.0
    %978 = vmatpush2.msra.mxu0 0.0
    %979 = vmatprep.subr.mxu0 0.0
    %980 = vmatpush2.msra.mxu0 0.0
    %981 = vmatprep.subr.mxu0 0.0
    %982 = vmatpush2.msra.mxu0 0.0
    %983 = vmatprep.subr.mxu0 0.0
    %984 = vmatpush2.msra.mxu0 0.0
    %985 = vmatprep.subr.mxu0 0.0
    %986 = vmatpush2.msra.mxu0 0.0
    %987 = vmatprep.subr.mxu0 0.0
    %988 = vmatpush2.msra.mxu0 0.0
    %989 = vmatprep.subr.mxu0 0.0
    %990 = vmatpush2.msra.mxu0 0.0
    %991 = vmatprep.subr.mxu0 0.0
    %992 = vmatpush2.msra.mxu0 0.0
    %993 = vmatprep.mubr.f32.mxu0 0.0
    %994 = vmatmul.mubr.f32.gmra.mxu0 %v38
    %v995 = vpop.f32.mrf.mxu0
    %v996 = vadd.f32 0.0, %v995
    %v997 = vpop.f32.mrf.mxu0
    %998 = vmatprep.mubr.f32.mxu0 0.0
    %999 = vmatmul.mubr.f32.gmra.mxu0 %v39
    %v1000 = vpop.f32.mrf.mxu0
    %v1001 = vadd.f32 0.0, %v1000
    %v1002 = vpop.f32.mrf.mxu0
    %1003 = vmatprep.mubr.f32.mxu0 0.0
    %1004 = vmatmul.mubr.f32.gmra.mxu0 %v40
    %v1005 = vpop.f32.mrf.mxu0
    %v1006 = vadd.f32 0.0, %v1005
    %v1007 = vpop.f32.mrf.mxu0
    %1008 = vmatprep.mubr.f32.mxu0 0.0
    %1009 = vmatmul.mubr.f32.gmra.mxu0 %v41
    %v1010 = vpop.f32.mrf.mxu0
    %v1011 = vadd.f32 0.0, %v1010
    %v1012 = vpop.f32.mrf.mxu0
    %1013 = vmatprep.mubr.f32.mxu0 0.0
    %1014 = vmatmul.mubr.f32.gmra.mxu0 %v42
    %v1015 = vpop.f32.mrf.mxu0
    %v1016 = vadd.f32 0.0, %v1015
    %v1017 = vpop.f32.mrf.mxu0
    %1018 = vmatprep.mubr.f32.mxu0 0.0
    %1019 = vmatmul.mubr.f32.gmra.mxu0 %v43
    %v1020 = vpop.f32.mrf.mxu0
    %v1021 = vadd.f32 0.0, %v1020
    %v1022 = vpop.f32.mrf.mxu0
    %1023 = vmatprep.mubr.f32.mxu0 0.0
    %1024 = vmatmul.mubr.f32.gmra.mxu0 %v44
    %v1025 = vpop.f32.mrf.mxu0
    %v1026 = vadd.f32 0.0, %v1025
    %v1027 = vpop.f32.mrf.mxu0
    %1028 = vmatprep.mubr.f32.mxu0 0.0
    %1029 = vmatmul.mubr.f32.gmra.mxu0 %v45
    %v1030 = vpop.f32.mrf.mxu0
    %v1031 = vadd.f32 0.0, %v1030
    %v1032 = vpop.f32.mrf.mxu0
    %1033 = vmatprep.mubr.f32.mxu0 0.0
    %1034 = vmatmul.mubr.f32.gmra.mxu0 %v46
    %v1035 = vpop.f32.mrf.mxu0
    %v1036 = vadd.f32 0.0, %v1035
    %v1037 = vpop.f32.mrf.mxu0
    %1038 = vmatprep.mubr.f32.mxu0 0.0
    %1039 = vmatmul.mubr.f32.gmra.mxu0 %v47
    %v1040 = vpop.f32.mrf.mxu0
    %v1041 = vadd.f32 0.0, %v1040
    %v1042 = vpop.f32.mrf.mxu0
    %1043 = vmatprep.mubr.f32.mxu0 0.0
    %1044 = vmatmul.mubr.f32.gmra.mxu0 %v48
    %v1045 = vpop.f32.mrf.mxu0
    %v1046 = vadd.f32 0.0, %v1045
    %v1047 = vpop.f32.mrf.mxu0
    %1048 = vmatprep.mubr.f32.mxu0 0.0
    %1049 = vmatmul.mubr.f32.gmra.mxu0 %v49
    %v1050 = vpop.f32.mrf.mxu0
    %v1051 = vadd.f32 0.0, %v1050
    %v1052 = vpop.f32.mrf.mxu0
    %1053 = vmatprep.mubr.f32.mxu0 0.0
    %1054 = vmatmul.mubr.f32.gmra.mxu0 %v50
    %v1055 = vpop.f32.mrf.mxu0
    %v1056 = vadd.f32 0.0, %v1055
    %v1057 = vpop.f32.mrf.mxu0
    %1058 = vmatprep.mubr.f32.mxu0 0.0
    %1059 = vmatmul.mubr.f32.gmra.mxu0 %v51
    %v1060 = vpop.f32.mrf.mxu0
    %v1061 = vadd.f32 0.0, %v1060
    %v1062 = vpop.f32.mrf.mxu0
    %1063 = vmatprep.mubr.f32.mxu0 0.0
    %1064 = vmatmul.mubr.f32.gmra.mxu0 %v52
    %v1065 = vpop.f32.mrf.mxu0
    %v1066 = vadd.f32 0.0, %v1065
    %v1067 = vpop.f32.mrf.mxu0
    %1068 = vmatprep.mubr.f32.mxu0 0.0
    %1069 = vmatmul.mubr.f32.gmra.mxu0 %v53
    %v1070 = vpop.f32.mrf.mxu0
    %v1071 = vadd.f32 0.0, %v1070
    %v1072 = vpop.f32.mrf.mxu0
    %1073 = vdwg.mxu0
    %1074 = vst [vmem:[#allocation5] sm:$0xff] %v996
    %1075 = vst [vmem:[#allocation5 + $0x8] sm:$0xff] %v1001
    %1076 = vst [vmem:[#allocation5 + $0x10] sm:$0xff] %v1006
    %1077 = vst [vmem:[#allocation5 + $0x18] sm:$0xff] %v1011
    %1078 = vst [vmem:[#allocation5 + $0x20] sm:$0xff] %v1016
    %1079 = vst [vmem:[#allocation5 + $0x28] sm:$0xff] %v1021
    %1080 = vst [vmem:[#allocation5 + $0x30] sm:$0xff] %v1026
    %1081 = vst [vmem:[#allocation5 + $0x38] sm:$0xff] %v1031
    %1082 = vst [vmem:[#allocation5 + $0x40] sm:$0xff] %v1036
    %1083 = vst [vmem:[#allocation5 + $0x48] sm:$0xff] %v1041
    %1084 = vst [vmem:[#allocation5 + $0x50] sm:$0xff] %v1046
    %1085 = vst [vmem:[#allocation5 + $0x58] sm:$0xff] %v1051
    %1086 = vst [vmem:[#allocation5 + $0x60] sm:$0xff] %v1056
    %1087 = vst [vmem:[#allocation5 + $0x68] sm:$0xff] %v1061
    %1088 = vst [vmem:[#allocation5 + $0x70] sm:$0xff] %v1066
    %1089 = vst [vmem:[#allocation5 + $0x78] sm:$0xff] %v1071
    // Predicated region
    $region30: #{tpu_custom_call.1} parent=1 // pred_check
      _
    $region31: #{tpu_custom_call.1} parent=1 // pred_check_branch
      %1091 = sbr.rel (0) target = $region33
    $region32: #{tpu_custom_call.1} parent=1 // pred_region
      %s1093 = ssub.s32 2048, 2048
      %1094 = vsyncadd [#allocation4], %s1093
      %s1095 = sshll.u32 [#allocation5], 4
      %s1096 = int_to_ptr.vmem [resolvable:$true] %s1095
      %1101 = dma.vmem_to_hbm [thread:$0]  %s1096, 2048, %s6, [#allocation4], 128, 128, 8
    $region33: #{tpu_custom_call.1} parent=1 // pred_fallthru
      _
    // Predicated region
    $region34: #{tpu_custom_call.1} parent=1 // pred_check
      _
    $region35: #{tpu_custom_call.1} parent=1 // pred_check_branch
      %1103 = sbr.rel (0) target = $region37
    $region36: #{tpu_custom_call.1} parent=1 // pred_region
      %1104 = dma.done [#allocation4], 2048
    $region37: #{tpu_custom_call.1} parent=1 // pred_fallthru
      _
    %1105 = vsyncpa [#allocation3], 1
    %1106 = vsyncpa [#allocation4], 1

</llo_original>
